<compile_context>
chip_gen: v6e
topology: v6e:2x2x1
jax: 0.10.0
libtpu: 0.0.40
codegen_flags: <defaults>
</compile_context>

<pallas_src>
import jax
import jax.numpy as jnp
from jax.experimental import pallas as pl
from jax.experimental.pallas import tpu as pltpu

DIM = 2            # data dimension (matches `dim = 2` in the module)
HIDDEN = 64        # hidden width of the MLP
IN_FEATS = DIM + 1
K_AUG = 8          # layer-1 contraction depth: [x0, x1, t, 1, 0, 0, 0, 0]
H_AUG = HIDDEN + 8 # hidden + bias-carrier row, padded to a sublane multiple


def vector_field_kernel(z_ref, w1_ref, w2_ref, o_ref):
    """z: (K_AUG, TB), w1: (H_AUG, K_AUG), w2: (DIM, H_AUG), o: (DIM, TB)."""
    # Layer 1 on the MXU.  Rows 0..63 of h are W1@[x;t] + b1; row 64 is the
    # constant 1 that carries b2 through the second matmul; the rest are 0.
    h = jnp.dot(w1_ref[...], z_ref[...], preferred_element_type=jnp.float32)
    h = jnp.maximum(h, 0.0)                     # ReLU (relu(1) == 1)
    # Layer 2 on the MXU; b2 is column HIDDEN of w2_aug.
    o_ref[...] = jnp.dot(w2_ref[...], h,
                         preferred_element_type=jnp.float32).astype(o_ref.dtype)


def _augment_params(w1, b1, w2, b2):
    """Fold concat + biases into the two augmented MXU operands."""
    w1_aug = jnp.zeros((H_AUG, K_AUG), jnp.float32)
    w1_aug = w1_aug.at[:HIDDEN, :IN_FEATS].set(w1.T)      # W1^T
    w1_aug = w1_aug.at[:HIDDEN, IN_FEATS].set(b1)         # b1 (hits the ones row)
    w1_aug = w1_aug.at[HIDDEN, IN_FEATS].set(1.0)         # bias-carrier row of h
    w2_aug = jnp.zeros((DIM, H_AUG), jnp.float32)
    w2_aug = w2_aug.at[:, :HIDDEN].set(w2.T)               # W2^T
    w2_aug = w2_aug.at[:, HIDDEN].set(b2)                  # b2
    return w1_aug, w2_aug


def vector_field(x, t, w1, b1, w2, b2, *, tile_b=None):
    """x: (B, DIM) f32, t: (B, 1) f32 -> (B, DIM) f32."""
    B = x.shape[0]
    B128 = ((B + 127) // 128) * 128            # lane-aligned batch

    if tile_b is None:
        # Single grid step for small batches; 8192-lane tiles for large ones.
        tile_b = B128 if B128 <= 16384 else 8192
    tile_b = max(128, (int(tile_b) // 128) * 128)
    tile_b = min(tile_b, B128)

    Bp = ((B + tile_b - 1) // tile_b) * tile_b
    grid = (Bp // tile_b,)

    # Batch-on-lane augmented input [x^T; t^T; 1; 0...] -> (K_AUG, Bp).
    # Only this small (8, B) slab is padded; x/t are never copied in HBM.
    z = jnp.concatenate(
        [x.T.astype(jnp.float32),
         t.T.astype(jnp.float32),
         jnp.ones((1, B), jnp.float32),
         jnp.zeros((K_AUG - IN_FEATS - 1, B), jnp.float32)], axis=0)
    if Bp != B:
        z = jnp.pad(z, ((0, 0), (0, Bp - B)))

    w1_aug, w2_aug = _augment_params(w1, b1, w2, b2)

    cost = pl.CostEstimate(
        flops=2 * Bp * (K_AUG * H_AUG + H_AUG * DIM),
        transcendentals=0,
        bytes_accessed=4 * (Bp * (K_AUG + DIM) + H_AUG * K_AUG + DIM * H_AUG),
    )

    out_t = pl.pallas_call(
        vector_field_kernel,
        out_shape=jax.ShapeDtypeStruct((DIM, Bp), jnp.float32),
        grid=grid,
        in_specs=[
            pl.BlockSpec((K_AUG, tile_b), lambda i: (0, i)),  # z tile (lane-dense)
            pl.BlockSpec((H_AUG, K_AUG), lambda i: (0, 0)),   # w1_aug, VMEM resident
            pl.BlockSpec((DIM, H_AUG), lambda i: (0, 0)),     # w2_aug, VMEM resident
        ],
        out_specs=pl.BlockSpec((DIM, tile_b), lambda i: (0, i)),  # lane-dense stores
        compiler_params=pltpu.CompilerParams(
            dimension_semantics=("parallel",)),  # v7x: 2 TCs split large batches
        cost_estimate=cost,
    )(z, w1_aug, w2_aug)

    return out_t[:, :B].T                      # back to (B, DIM)


def init_params(key):
    """Deterministic init mimicking nn.Linear's U(-1/sqrt(fan_in), 1/sqrt(fan_in))."""
    k1, k2, k3, k4 = jax.random.split(key, 4)
    bound1 = 1.0 / jnp.sqrt(IN_FEATS)
    bound2 = 1.0 / jnp.sqrt(HIDDEN)
    # Stored as (in, out) == W.T relative to PyTorch's (out, in) layout.
    w1 = jax.random.uniform(k1, (IN_FEATS, HIDDEN), jnp.float32, -bound1, bound1)
    b1 = jax.random.uniform(k2, (HIDDEN,), jnp.float32, -bound1, bound1)
    w2 = jax.random.uniform(k3, (HIDDEN, DIM), jnp.float32, -bound2, bound2)
    b2 = jax.random.uniform(k4, (DIM,), jnp.float32, -bound2, bound2)
    return w1, b1, w2, b2


if __name__ == "__main__":
    key = jax.random.PRNGKey(0)
    k_params, k_noise = jax.random.split(key)

    w1, b1, w2, b2 = init_params(k_params)

    # Mirror the script's setup: num_samples noise samples scaled by 2 and a
    # scalar time broadcast to (B, 1).  B = 1000 -> one 1024-lane grid step.
    batch = 1000
    noise_data = jax.random.normal(k_noise, (batch, DIM), jnp.float32) * 2.0
    x = noise_data
    t = jnp.full((batch, 1), 0.3, jnp.float32)

    out = jax.block_until_ready(vector_field(x, t, w1, b1, w2, b2))

    # Pure-JAX reference of the same math (cat -> Linear -> ReLU -> Linear).
    z_ref = jnp.concatenate([x, t], axis=1)
    ref = jnp.maximum(z_ref @ w1 + b1, 0.0) @ w2 + b2
    assert out.shape == (batch, DIM)
    assert jnp.allclose(out, ref, atol=1e-4, rtol=1e-4)

    # Multi-grid-step tiling path (tile_b=256 -> Bp=1024, 4 steps).
    out_tiled = jax.block_until_ready(
        vector_field(x, t, w1, b1, w2, b2, tile_b=256))
    assert jnp.allclose(out_tiled, ref, atol=1e-4, rtol=1e-4)

    # Tiny batch (matches `x = noise_data[0:1]` in the original script).
    out_small = jax.block_until_ready(vector_field(x[:1], t[:1], w1, b1, w2, b2))
    assert jnp.allclose(out_small, ref[:1], atol=1e-4, rtol=1e-4)

    print("KERNEL_OK")
</pallas_src>

<mosaic_0001>
module attributes {stable_mosaic.version = 11 : i64} {
  func.func @vector_field_kernel(%arg0: i32, %arg1: memref<8x1024xf32, #tpu.memory_space<vmem>>, %arg2: memref<72x8xf32, #tpu.memory_space<vmem>>, %arg3: memref<2x72xf32, #tpu.memory_space<vmem>>, %arg4: memref<2x1024xf32, #tpu.memory_space<vmem>>) attributes {dimension_semantics = [#tpu.dimension_semantics<parallel>], iteration_bounds = array<i64: 1>, scalar_prefetch = 0 : i64, scratch_operands = 0 : i64, tpu.core_type = #tpu.core_type<tc>, window_params = [{transform_indices = @transform_0, window_bounds = array<i64: 8, 1024>}, {pipeline_mode = #tpu.pipeline_mode<synchronous>, transform_indices = @transform_1, window_bounds = array<i64: 72, 8>}, {pipeline_mode = #tpu.pipeline_mode<synchronous>, transform_indices = @transform_2, window_bounds = array<i64: 2, 72>}, {transform_indices = @transform_3, window_bounds = array<i64: 2, 1024>}]} {
    %c0 = arith.constant 0 : index
    %c0_0 = arith.constant 0 : index
    %0 = vector.load %arg2[%c0, %c0_0] : memref<72x8xf32, #tpu.memory_space<vmem>>, vector<72x8xf32>
    %c0_1 = arith.constant 0 : index
    %c0_2 = arith.constant 0 : index
    %1 = vector.load %arg1[%c0_1, %c0_2] : memref<8x1024xf32, #tpu.memory_space<vmem>>, vector<8x1024xf32>
    %cst = arith.constant dense<0.000000e+00> : vector<72x1024xf32>
    %2 = tpu.matmul %0, %1, %cst {dimension_numbers = #tpu.dot_dimension_numbers<[1], [0], [0], [1], [0, 0, 1, 1], [], []>} : vector<72x8xf32>, vector<8x1024xf32>, vector<72x1024xf32> -> vector<72x1024xf32>
    %cst_3 = arith.constant 0.000000e+00 : f32
    %3 = vector.broadcast %cst_3 : f32 to vector<72x1024xf32>
    %4 = arith.maximumf %2, %3 : vector<72x1024xf32>
    %c0_4 = arith.constant 0 : index
    %c0_5 = arith.constant 0 : index
    %5 = vector.load %arg3[%c0_4, %c0_5] : memref<2x72xf32, #tpu.memory_space<vmem>>, vector<2x72xf32>
    %cst_6 = arith.constant dense<0.000000e+00> : vector<2x1024xf32>
    %6 = tpu.matmul %5, %4, %cst_6 {dimension_numbers = #tpu.dot_dimension_numbers<[1], [0], [0], [1], [0, 0, 1, 1], [], []>} : vector<2x72xf32>, vector<72x1024xf32>, vector<2x1024xf32> -> vector<2x1024xf32>
    %c0_7 = arith.constant 0 : index
    %c0_8 = arith.constant 0 : index
    %7 = vector.load %arg4[%c0_7, %c0_8] : memref<2x1024xf32, #tpu.memory_space<vmem>>, vector<2x1024xf32>
    tpu.vector_store %arg4[%c0_7, %c0_8], %6 {strides = array<i32>} : memref<2x1024xf32, #tpu.memory_space<vmem>>, vector<2x1024xf32>,
    return
  }
  func.func @transform_0(%arg0: i32) -> (i32, i32) {
    %c0_i32 = arith.constant 0 : i32
    %c0_i32_0 = arith.constant 0 : i32
    return %c0_i32, %arg0 : i32, i32
  }
  func.func @transform_1(%arg0: i32) -> (i32, i32) {
    %c0_i32 = arith.constant 0 : i32
    %c0_i32_0 = arith.constant 0 : i32
    %c0_i32_1 = arith.constant 0 : i32
    return %c0_i32, %c0_i32_0 : i32, i32
  }
  func.func @transform_2(%arg0: i32) -> (i32, i32) {
    %c0_i32 = arith.constant 0 : i32
    %c0_i32_0 = arith.constant 0 : i32
    %c0_i32_1 = arith.constant 0 : i32
    return %c0_i32, %c0_i32_0 : i32, i32
  }
  func.func @transform_3(%arg0: i32) -> (i32, i32) {
    %c0_i32 = arith.constant 0 : i32
    %c0_i32_0 = arith.constant 0 : i32
    return %c0_i32, %arg0 : i32, i32
  }
}

</mosaic_0001>

<llo_original>
// kernel: tpu_custom_call.1
$region0: #{tpu_custom_call.1}
  #allocation0 [shape = 'u32[]', space=smem, size = 0x4, offset = 0x4, fixed_abs, tag = 'smem constant byte address 0x4 - core index']
  #allocation1 [shape = 'u32[144,128]{1,0:T(1,128)}', space=vmem, size = 0x12000, scoped, tag = 'internal scratch']
  %s0 = inlined_call_operand.vmem [shape: f32[8,1024], index: 0, kind: input, shape index: {}]
  %s1 = inlined_call_operand.vmem [shape: f32[72,8], index: 1, kind: input, shape index: {}]
  %s2 = inlined_call_operand.vmem [shape: f32[2,72], index: 2, kind: input, shape index: {}]
  %s3 = inlined_call_operand.hbm [shape: f32[2,1024], index: 3, kind: output, shape index: {}]
  %s4 = sld [smem:[#allocation0]]
  $region22: #{tpu_custom_call.1} parent=0
    _
  %s6 = ssub.s32 1, %s4
  %s7 = scalar_select 0, %s6, %s4
  $region1: #{tpu_custom_call.1} parent=0
    #allocation2 [shape = 'u8[8192]{0}', space=vmem, size = 0x2000, scoped, tag = 'output window, operand 0, single buffered']
    #allocation3 [shape = 's32[1]{0}', space=sflag, size = 0x4, scoped, tag = 'scoped memory for tpu_custom_call.1']
    %8 = vsyncpa [#allocation3], 0
    // Predicated region
    $region2: #{tpu_custom_call.1} parent=1 // pred_check
      _
    $region3: #{tpu_custom_call.1} parent=1 // pred_check_branch
      %10 = sbr.rel (0) target = $region5
    $region4: #{tpu_custom_call.1} parent=1 // pred_region
      _
    $region5: #{tpu_custom_call.1} parent=1 // pred_fallthru
      _
    // Predicated region
    $region6: #{tpu_custom_call.1} parent=1 // pred_check
      _
    $region7: #{tpu_custom_call.1} parent=1 // pred_check_branch
      %12 = sbr.rel (0) target = $region9
    $region8: #{tpu_custom_call.1} parent=1 // pred_region
      _
    $region9: #{tpu_custom_call.1} parent=1 // pred_fallthru
      _
    // Predicated region
    $region10: #{tpu_custom_call.1} parent=1 // pred_check
      _
    $region11: #{tpu_custom_call.1} parent=1 // pred_check_branch
      %14 = sbr.rel (0) target = $region13
    $region12: #{tpu_custom_call.1} parent=1 // pred_region
      _
    $region13: #{tpu_custom_call.1} parent=1 // pred_fallthru
      _
    %v15 = vld [vmem:[%s1] sm:$0xff]
    %v16 = vld [vmem:[%s1 + $0x8] sm:$0xff]
    %v17 = vld [vmem:[%s1 + $0x10] sm:$0xff]
    %v18 = vld [vmem:[%s1 + $0x18] sm:$0xff]
    %v19 = vld [vmem:[%s1 + $0x20] sm:$0xff]
    %v20 = vld [vmem:[%s1 + $0x28] sm:$0xff]
    %v21 = vld [vmem:[%s1 + $0x30] sm:$0xff]
    %v22 = vld [vmem:[%s1 + $0x38] sm:$0xff]
    %v23 = vld [vmem:[%s1 + $0x40] sm:$0xff]
    %v24 = vld [vmem:[%s0] sm:$0xff]
    %v25 = vld [vmem:[%s0 + $0x8] sm:$0xff]
    %v26 = vld [vmem:[%s0 + $0x10] sm:$0xff]
    %v27 = vld [vmem:[%s0 + $0x18] sm:$0xff]
    %v28 = vld [vmem:[%s0 + $0x20] sm:$0xff]
    %v29 = vld [vmem:[%s0 + $0x28] sm:$0xff]
    %v30 = vld [vmem:[%s0 + $0x30] sm:$0xff]
    %v31 = vld [vmem:[%s0 + $0x38] sm:$0xff]
    %vm32 = vcmask 64512
    %v34 = vsel %vm32, %v15, 0
    %v37 = vsel %vm32, %v16, 0
    %v40 = vsel %vm32, %v17, 0
    %v43 = vsel %vm32, %v18, 0
    %v46 = vsel %vm32, %v19, 0
    %v49 = vsel %vm32, %v20, 0
    %v52 = vsel %vm32, %v21, 0
    %v55 = vsel %vm32, %v22, 0
    %v58 = vsel %vm32, %v23, 0
    %60 = vmatprep.subr.mxu0 0.0
    %61 = vmatpush1.msra.mxu0 0.0
    %62 = vmatprep.subr.mxu0 0.0
    %63 = vmatpush1.msra.mxu0 0.0
    %64 = vmatprep.subr.mxu0 0.0
    %65 = vmatpush1.msra.mxu0 0.0
    %66 = vmatprep.subr.mxu0 0.0
    %67 = vmatpush1.msra.mxu0 0.0
    %68 = vmatprep.subr.mxu0 0.0
    %69 = vmatpush1.msra.mxu0 0.0
    %70 = vmatprep.subr.mxu0 0.0
    %71 = vmatpush1.msra.mxu0 0.0
    %72 = vmatprep.subr.mxu0 0.0
    %73 = vmatpush1.msra.mxu0 0.0
    %74 = vmatprep.subr.mxu0 0.0
    %75 = vmatpush1.msra.mxu0 0.0
    %76 = vmatprep.subr.mxu0 0.0
    %77 = vmatpush1.msra.mxu0 0.0
    %78 = vmatprep.subr.mxu0 0.0
    %79 = vmatpush1.msra.mxu0 0.0
    %80 = vmatprep.subr.mxu0 0.0
    %81 = vmatpush1.msra.mxu0 0.0
    %82 = vmatprep.subr.mxu0 0.0
    %83 = vmatpush1.msra.mxu0 0.0
    %84 = vmatprep.subr.mxu0 0.0
    %85 = vmatpush1.msra.mxu0 0.0
    %86 = vmatprep.subr.mxu0 0.0
    %87 = vmatpush1.msra.mxu0 0.0
    %88 = vmatprep.subr.mxu0 0.0
    %89 = vmatpush1.msra.mxu0 0.0
    %90 = vmatprep.subr.mxu0 %v25
    %91 = vmatpush1.msra.mxu0 %v24
    %92 = vmatprep.subr.mxu0 0.0
    %93 = vmatpush2.msra.mxu0 0.0
    %94 = vmatprep.subr.mxu0 0.0
    %95 = vmatpush2.msra.mxu0 0.0
    %96 = vmatprep.subr.mxu0 0.0
    %97 = vmatpush2.msra.mxu0 0.0
    %98 = vmatprep.subr.mxu0 0.0
    %99 = vmatpush2.msra.mxu0 0.0
    %100 = vmatprep.subr.mxu0 0.0
    %101 = vmatpush2.msra.mxu0 0.0
    %102 = vmatprep.subr.mxu0 0.0
    %103 = vmatpush2.msra.mxu0 0.0
    %104 = vmatprep.subr.mxu0 0.0
    %105 = vmatpush2.msra.mxu0 0.0
    %106 = vmatprep.subr.mxu0 0.0
    %107 = vmatpush2.msra.mxu0 0.0
    %108 = vmatprep.subr.mxu0 0.0
    %109 = vmatpush2.msra.mxu0 0.0
    %110 = vmatprep.subr.mxu0 0.0
    %111 = vmatpush2.msra.mxu0 0.0
    %112 = vmatprep.subr.mxu0 0.0
    %113 = vmatpush2.msra.mxu0 0.0
    %114 = vmatprep.subr.mxu0 0.0
    %115 = vmatpush2.msra.mxu0 0.0
    %116 = vmatprep.subr.mxu0 0.0
    %117 = vmatpush2.msra.mxu0 0.0
    %118 = vmatprep.subr.mxu0 0.0
    %119 = vmatpush2.msra.mxu0 0.0
    %120 = vmatprep.subr.mxu0 0.0
    %121 = vmatpush2.msra.mxu0 0.0
    %122 = vmatprep.subr.mxu0 0.0
    %123 = vmatpush2.msra.mxu0 0.0
    %124 = vmatprep.mubr.f32.mxu0 0.0
    %125 = vmatmul.mubr.f32.gmra.mxu0 %v34
    %v126 = vpop.f32.mrf.mxu0
    %v127 = vadd.f32 0.0, %v126
    %v128 = vpop.f32.mrf.mxu0
    %v129 = vadd.f32 0.0, %v128
    %130 = vmatprep.mubr.f32.mxu0 0.0
    %131 = vmatmul.mubr.f32.gmra.mxu0 %v37
    %v132 = vpop.f32.mrf.mxu0
    %v133 = vadd.f32 0.0, %v132
    %v134 = vpop.f32.mrf.mxu0
    %v135 = vadd.f32 0.0, %v134
    %136 = vmatprep.mubr.f32.mxu0 0.0
    %137 = vmatmul.mubr.f32.gmra.mxu0 %v40
    %v138 = vpop.f32.mrf.mxu0
    %v139 = vadd.f32 0.0, %v138
    %v140 = vpop.f32.mrf.mxu0
    %v141 = vadd.f32 0.0, %v140
    %142 = vmatprep.mubr.f32.mxu0 0.0
    %143 = vmatmul.mubr.f32.gmra.mxu0 %v43
    %v144 = vpop.f32.mrf.mxu0
    %v145 = vadd.f32 0.0, %v144
    %v146 = vpop.f32.mrf.mxu0
    %v147 = vadd.f32 0.0, %v146
    %148 = vmatprep.mubr.f32.mxu0 0.0
    %149 = vmatmul.mubr.f32.gmra.mxu0 %v46
    %v150 = vpop.f32.mrf.mxu0
    %v151 = vadd.f32 0.0, %v150
    %v152 = vpop.f32.mrf.mxu0
    %v153 = vadd.f32 0.0, %v152
    %154 = vmatprep.mubr.f32.mxu0 0.0
    %155 = vmatmul.mubr.f32.gmra.mxu0 %v49
    %v156 = vpop.f32.mrf.mxu0
    %v157 = vadd.f32 0.0, %v156
    %v158 = vpop.f32.mrf.mxu0
    %v159 = vadd.f32 0.0, %v158
    %160 = vmatprep.mubr.f32.mxu0 0.0
    %161 = vmatmul.mubr.f32.gmra.mxu0 %v52
    %v162 = vpop.f32.mrf.mxu0
    %v163 = vadd.f32 0.0, %v162
    %v164 = vpop.f32.mrf.mxu0
    %v165 = vadd.f32 0.0, %v164
    %166 = vmatprep.mubr.f32.mxu0 0.0
    %167 = vmatmul.mubr.f32.gmra.mxu0 %v55
    %v168 = vpop.f32.mrf.mxu0
    %v169 = vadd.f32 0.0, %v168
    %v170 = vpop.f32.mrf.mxu0
    %v171 = vadd.f32 0.0, %v170
    %172 = vmatprep.mubr.f32.mxu0 0.0
    %173 = vmatmul.mubr.f32.gmra.mxu0 %v58
    %v174 = vpop.f32.mrf.mxu0
    %v175 = vadd.f32 0.0, %v174
    %v176 = vpop.f32.mrf.mxu0
    %v177 = vadd.f32 0.0, %v176
    %178 = vdwg.mxu0
    %179 = vmatprep.subr.mxu0 0.0
    %180 = vmatpush1.msra.mxu0 0.0
    %181 = vmatprep.subr.mxu0 0.0
    %182 = vmatpush1.msra.mxu0 0.0
    %183 = vmatprep.subr.mxu0 0.0
    %184 = vmatpush1.msra.mxu0 0.0
    %185 = vmatprep.subr.mxu0 0.0
    %186 = vmatpush1.msra.mxu0 0.0
    %187 = vmatprep.subr.mxu0 0.0
    %188 = vmatpush1.msra.mxu0 0.0
    %189 = vmatprep.subr.mxu0 0.0
    %190 = vmatpush1.msra.mxu0 0.0
    %191 = vmatprep.subr.mxu0 0.0
    %192 = vmatpush1.msra.mxu0 0.0
    %193 = vmatprep.subr.mxu0 0.0
    %194 = vmatpush1.msra.mxu0 0.0
    %195 = vmatprep.subr.mxu0 0.0
    %196 = vmatpush1.msra.mxu0 0.0
    %197 = vmatprep.subr.mxu0 0.0
    %198 = vmatpush1.msra.mxu0 0.0
    %199 = vmatprep.subr.mxu0 0.0
    %200 = vmatpush1.msra.mxu0 0.0
    %201 = vmatprep.subr.mxu0 0.0
    %202 = vmatpush1.msra.mxu0 0.0
    %203 = vmatprep.subr.mxu0 0.0
    %204 = vmatpush1.msra.mxu0 0.0
    %205 = vmatprep.subr.mxu0 0.0
    %206 = vmatpush1.msra.mxu0 0.0
    %207 = vmatprep.subr.mxu0 0.0
    %208 = vmatpush1.msra.mxu0 0.0
    %209 = vmatprep.subr.mxu0 %v27
    %210 = vmatpush1.msra.mxu0 %v26
    %211 = vmatprep.subr.mxu0 0.0
    %212 = vmatpush2.msra.mxu0 0.0
    %213 = vmatprep.subr.mxu0 0.0
    %214 = vmatpush2.msra.mxu0 0.0
    %215 = vmatprep.subr.mxu0 0.0
    %216 = vmatpush2.msra.mxu0 0.0
    %217 = vmatprep.subr.mxu0 0.0
    %218 = vmatpush2.msra.mxu0 0.0
    %219 = vmatprep.subr.mxu0 0.0
    %220 = vmatpush2.msra.mxu0 0.0
    %221 = vmatprep.subr.mxu0 0.0
    %222 = vmatpush2.msra.mxu0 0.0
    %223 = vmatprep.subr.mxu0 0.0
    %224 = vmatpush2.msra.mxu0 0.0
    %225 = vmatprep.subr.mxu0 0.0
    %226 = vmatpush2.msra.mxu0 0.0
    %227 = vmatprep.subr.mxu0 0.0
    %228 = vmatpush2.msra.mxu0 0.0
    %229 = vmatprep.subr.mxu0 0.0
    %230 = vmatpush2.msra.mxu0 0.0
    %231 = vmatprep.subr.mxu0 0.0
    %232 = vmatpush2.msra.mxu0 0.0
    %233 = vmatprep.subr.mxu0 0.0
    %234 = vmatpush2.msra.mxu0 0.0
    %235 = vmatprep.subr.mxu0 0.0
    %236 = vmatpush2.msra.mxu0 0.0
    %237 = vmatprep.subr.mxu0 0.0
    %238 = vmatpush2.msra.mxu0 0.0
    %239 = vmatprep.subr.mxu0 0.0
    %240 = vmatpush2.msra.mxu0 0.0
    %241 = vmatprep.subr.mxu0 0.0
    %242 = vmatpush2.msra.mxu0 0.0
    %243 = vmatprep.mubr.f32.mxu0 0.0
    %244 = vmatmul.mubr.f32.gmra.mxu0 %v34
    %v245 = vpop.f32.mrf.mxu0
    %v246 = vadd.f32 0.0, %v245
    %v247 = vpop.f32.mrf.mxu0
    %v248 = vadd.f32 0.0, %v247
    %249 = vmatprep.mubr.f32.mxu0 0.0
    %250 = vmatmul.mubr.f32.gmra.mxu0 %v37
    %v251 = vpop.f32.mrf.mxu0
    %v252 = vadd.f32 0.0, %v251
    %v253 = vpop.f32.mrf.mxu0
    %v254 = vadd.f32 0.0, %v253
    %255 = vmatprep.mubr.f32.mxu0 0.0
    %256 = vmatmul.mubr.f32.gmra.mxu0 %v40
    %v257 = vpop.f32.mrf.mxu0
    %v258 = vadd.f32 0.0, %v257
    %v259 = vpop.f32.mrf.mxu0
    %v260 = vadd.f32 0.0, %v259
    %261 = vmatprep.mubr.f32.mxu0 0.0
    %262 = vmatmul.mubr.f32.gmra.mxu0 %v43
    %v263 = vpop.f32.mrf.mxu0
    %v264 = vadd.f32 0.0, %v263
    %v265 = vpop.f32.mrf.mxu0
    %v266 = vadd.f32 0.0, %v265
    %267 = vmatprep.mubr.f32.mxu0 0.0
    %268 = vmatmul.mubr.f32.gmra.mxu0 %v46
    %v269 = vpop.f32.mrf.mxu0
    %v270 = vadd.f32 0.0, %v269
    %v271 = vpop.f32.mrf.mxu0
    %v272 = vadd.f32 0.0, %v271
    %273 = vmatprep.mubr.f32.mxu0 0.0
    %274 = vmatmul.mubr.f32.gmra.mxu0 %v49
    %v275 = vpop.f32.mrf.mxu0
    %v276 = vadd.f32 0.0, %v275
    %v277 = vpop.f32.mrf.mxu0
    %v278 = vadd.f32 0.0, %v277
    %279 = vmatprep.mubr.f32.mxu0 0.0
    %280 = vmatmul.mubr.f32.gmra.mxu0 %v52
    %v281 = vpop.f32.mrf.mxu0
    %v282 = vadd.f32 0.0, %v281
    %v283 = vpop.f32.mrf.mxu0
    %v284 = vadd.f32 0.0, %v283
    %285 = vmatprep.mubr.f32.mxu0 0.0
    %286 = vmatmul.mubr.f32.gmra.mxu0 %v55
    %v287 = vpop.f32.mrf.mxu0
    %v288 = vadd.f32 0.0, %v287
    %v289 = vpop.f32.mrf.mxu0
    %v290 = vadd.f32 0.0, %v289
    %291 = vmatprep.mubr.f32.mxu0 0.0
    %292 = vmatmul.mubr.f32.gmra.mxu0 %v58
    %v293 = vpop.f32.mrf.mxu0
    %v294 = vadd.f32 0.0, %v293
    %v295 = vpop.f32.mrf.mxu0
    %v296 = vadd.f32 0.0, %v295
    %297 = vdwg.mxu0
    %298 = vmatprep.subr.mxu0 0.0
    %299 = vmatpush1.msra.mxu0 0.0
    %300 = vmatprep.subr.mxu0 0.0
    %301 = vmatpush1.msra.mxu0 0.0
    %302 = vmatprep.subr.mxu0 0.0
    %303 = vmatpush1.msra.mxu0 0.0
    %304 = vmatprep.subr.mxu0 0.0
    %305 = vmatpush1.msra.mxu0 0.0
    %306 = vmatprep.subr.mxu0 0.0
    %307 = vmatpush1.msra.mxu0 0.0
    %308 = vmatprep.subr.mxu0 0.0
    %309 = vmatpush1.msra.mxu0 0.0
    %310 = vmatprep.subr.mxu0 0.0
    %311 = vmatpush1.msra.mxu0 0.0
    %312 = vmatprep.subr.mxu0 0.0
    %313 = vmatpush1.msra.mxu0 0.0
    %314 = vmatprep.subr.mxu0 0.0
    %315 = vmatpush1.msra.mxu0 0.0
    %316 = vmatprep.subr.mxu0 0.0
    %317 = vmatpush1.msra.mxu0 0.0
    %318 = vmatprep.subr.mxu0 0.0
    %319 = vmatpush1.msra.mxu0 0.0
    %320 = vmatprep.subr.mxu0 0.0
    %321 = vmatpush1.msra.mxu0 0.0
    %322 = vmatprep.subr.mxu0 0.0
    %323 = vmatpush1.msra.mxu0 0.0
    %324 = vmatprep.subr.mxu0 0.0
    %325 = vmatpush1.msra.mxu0 0.0
    %326 = vmatprep.subr.mxu0 0.0
    %327 = vmatpush1.msra.mxu0 0.0
    %328 = vmatprep.subr.mxu0 %v29
    %329 = vmatpush1.msra.mxu0 %v28
    %330 = vmatprep.subr.mxu0 0.0
    %331 = vmatpush2.msra.mxu0 0.0
    %332 = vmatprep.subr.mxu0 0.0
    %333 = vmatpush2.msra.mxu0 0.0
    %334 = vmatprep.subr.mxu0 0.0
    %335 = vmatpush2.msra.mxu0 0.0
    %336 = vmatprep.subr.mxu0 0.0
    %337 = vmatpush2.msra.mxu0 0.0
    %338 = vmatprep.subr.mxu0 0.0
    %339 = vmatpush2.msra.mxu0 0.0
    %340 = vmatprep.subr.mxu0 0.0
    %341 = vmatpush2.msra.mxu0 0.0
    %342 = vmatprep.subr.mxu0 0.0
    %343 = vmatpush2.msra.mxu0 0.0
    %344 = vmatprep.subr.mxu0 0.0
    %345 = vmatpush2.msra.mxu0 0.0
    %346 = vmatprep.subr.mxu0 0.0
    %347 = vmatpush2.msra.mxu0 0.0
    %348 = vmatprep.subr.mxu0 0.0
    %349 = vmatpush2.msra.mxu0 0.0
    %350 = vmatprep.subr.mxu0 0.0
    %351 = vmatpush2.msra.mxu0 0.0
    %352 = vmatprep.subr.mxu0 0.0
    %353 = vmatpush2.msra.mxu0 0.0
    %354 = vmatprep.subr.mxu0 0.0
    %355 = vmatpush2.msra.mxu0 0.0
    %356 = vmatprep.subr.mxu0 0.0
    %357 = vmatpush2.msra.mxu0 0.0
    %358 = vmatprep.subr.mxu0 0.0
    %359 = vmatpush2.msra.mxu0 0.0
    %360 = vmatprep.subr.mxu0 0.0
    %361 = vmatpush2.msra.mxu0 0.0
    %362 = vmatprep.mubr.f32.mxu0 0.0
    %363 = vmatmul.mubr.f32.gmra.mxu0 %v34
    %v364 = vpop.f32.mrf.mxu0
    %v365 = vadd.f32 0.0, %v364
    %v366 = vpop.f32.mrf.mxu0
    %v367 = vadd.f32 0.0, %v366
    %368 = vmatprep.mubr.f32.mxu0 0.0
    %369 = vmatmul.mubr.f32.gmra.mxu0 %v37
    %v370 = vpop.f32.mrf.mxu0
    %v371 = vadd.f32 0.0, %v370
    %v372 = vpop.f32.mrf.mxu0
    %v373 = vadd.f32 0.0, %v372
    %374 = vmatprep.mubr.f32.mxu0 0.0
    %375 = vmatmul.mubr.f32.gmra.mxu0 %v40
    %v376 = vpop.f32.mrf.mxu0
    %v377 = vadd.f32 0.0, %v376
    %v378 = vpop.f32.mrf.mxu0
    %v379 = vadd.f32 0.0, %v378
    %380 = vmatprep.mubr.f32.mxu0 0.0
    %381 = vmatmul.mubr.f32.gmra.mxu0 %v43
    %v382 = vpop.f32.mrf.mxu0
    %v383 = vadd.f32 0.0, %v382
    %v384 = vpop.f32.mrf.mxu0
    %v385 = vadd.f32 0.0, %v384
    %386 = vmatprep.mubr.f32.mxu0 0.0
    %387 = vmatmul.mubr.f32.gmra.mxu0 %v46
    %v388 = vpop.f32.mrf.mxu0
    %v389 = vadd.f32 0.0, %v388
    %v390 = vpop.f32.mrf.mxu0
    %v391 = vadd.f32 0.0, %v390
    %392 = vmatprep.mubr.f32.mxu0 0.0
    %393 = vmatmul.mubr.f32.gmra.mxu0 %v49
    %v394 = vpop.f32.mrf.mxu0
    %v395 = vadd.f32 0.0, %v394
    %v396 = vpop.f32.mrf.mxu0
    %v397 = vadd.f32 0.0, %v396
    %398 = vmatprep.mubr.f32.mxu0 0.0
    %399 = vmatmul.mubr.f32.gmra.mxu0 %v52
    %v400 = vpop.f32.mrf.mxu0
    %v401 = vadd.f32 0.0, %v400
    %v402 = vpop.f32.mrf.mxu0
    %v403 = vadd.f32 0.0, %v402
    %404 = vmatprep.mubr.f32.mxu0 0.0
    %405 = vmatmul.mubr.f32.gmra.mxu0 %v55
    %v406 = vpop.f32.mrf.mxu0
    %v407 = vadd.f32 0.0, %v406
    %v408 = vpop.f32.mrf.mxu0
    %v409 = vadd.f32 0.0, %v408
    %410 = vmatprep.mubr.f32.mxu0 0.0
    %411 = vmatmul.mubr.f32.gmra.mxu0 %v58
    %v412 = vpop.f32.mrf.mxu0
    %v413 = vadd.f32 0.0, %v412
    %v414 = vpop.f32.mrf.mxu0
    %v415 = vadd.f32 0.0, %v414
    %416 = vdwg.mxu0
    %417 = vmatprep.subr.mxu0 0.0
    %418 = vmatpush1.msra.mxu0 0.0
    %419 = vmatprep.subr.mxu0 0.0
    %420 = vmatpush1.msra.mxu0 0.0
    %421 = vmatprep.subr.mxu0 0.0
    %422 = vmatpush1.msra.mxu0 0.0
    %423 = vmatprep.subr.mxu0 0.0
    %424 = vmatpush1.msra.mxu0 0.0
    %425 = vmatprep.subr.mxu0 0.0
    %426 = vmatpush1.msra.mxu0 0.0
    %427 = vmatprep.subr.mxu0 0.0
    %428 = vmatpush1.msra.mxu0 0.0
    %429 = vmatprep.subr.mxu0 0.0
    %430 = vmatpush1.msra.mxu0 0.0
    %431 = vmatprep.subr.mxu0 0.0
    %432 = vmatpush1.msra.mxu0 0.0
    %433 = vmatprep.subr.mxu0 0.0
    %434 = vmatpush1.msra.mxu0 0.0
    %435 = vmatprep.subr.mxu0 0.0
    %436 = vmatpush1.msra.mxu0 0.0
    %437 = vmatprep.subr.mxu0 0.0
    %438 = vmatpush1.msra.mxu0 0.0
    %439 = vmatprep.subr.mxu0 0.0
    %440 = vmatpush1.msra.mxu0 0.0
    %441 = vmatprep.subr.mxu0 0.0
    %442 = vmatpush1.msra.mxu0 0.0
    %443 = vmatprep.subr.mxu0 0.0
    %444 = vmatpush1.msra.mxu0 0.0
    %445 = vmatprep.subr.mxu0 0.0
    %446 = vmatpush1.msra.mxu0 0.0
    %447 = vmatprep.subr.mxu0 %v31
    %448 = vmatpush1.msra.mxu0 %v30
    %449 = vmatprep.subr.mxu0 0.0
    %450 = vmatpush2.msra.mxu0 0.0
    %451 = vmatprep.subr.mxu0 0.0
    %452 = vmatpush2.msra.mxu0 0.0
    %453 = vmatprep.subr.mxu0 0.0
    %454 = vmatpush2.msra.mxu0 0.0
    %455 = vmatprep.subr.mxu0 0.0
    %456 = vmatpush2.msra.mxu0 0.0
    %457 = vmatprep.subr.mxu0 0.0
    %458 = vmatpush2.msra.mxu0 0.0
    %459 = vmatprep.subr.mxu0 0.0
    %460 = vmatpush2.msra.mxu0 0.0
    %461 = vmatprep.subr.mxu0 0.0
    %462 = vmatpush2.msra.mxu0 0.0
    %463 = vmatprep.subr.mxu0 0.0
    %464 = vmatpush2.msra.mxu0 0.0
    %465 = vmatprep.subr.mxu0 0.0
    %466 = vmatpush2.msra.mxu0 0.0
    %467 = vmatprep.subr.mxu0 0.0
    %468 = vmatpush2.msra.mxu0 0.0
    %469 = vmatprep.subr.mxu0 0.0
    %470 = vmatpush2.msra.mxu0 0.0
    %471 = vmatprep.subr.mxu0 0.0
    %472 = vmatpush2.msra.mxu0 0.0
    %473 = vmatprep.subr.mxu0 0.0
    %474 = vmatpush2.msra.mxu0 0.0
    %475 = vmatprep.subr.mxu0 0.0
    %476 = vmatpush2.msra.mxu0 0.0
    %477 = vmatprep.subr.mxu0 0.0
    %478 = vmatpush2.msra.mxu0 0.0
    %479 = vmatprep.subr.mxu0 0.0
    %480 = vmatpush2.msra.mxu0 0.0
    %481 = vmatprep.mubr.f32.mxu0 0.0
    %482 = vmatmul.mubr.f32.gmra.mxu0 %v34
    %v483 = vpop.f32.mrf.mxu0
    %v484 = vadd.f32 0.0, %v483
    %v485 = vpop.f32.mrf.mxu0
    %v486 = vadd.f32 0.0, %v485
    %487 = vmatprep.mubr.f32.mxu0 0.0
    %488 = vmatmul.mubr.f32.gmra.mxu0 %v37
    %v489 = vpop.f32.mrf.mxu0
    %v490 = vadd.f32 0.0, %v489
    %v491 = vpop.f32.mrf.mxu0
    %v492 = vadd.f32 0.0, %v491
    %493 = vmatprep.mubr.f32.mxu0 0.0
    %494 = vmatmul.mubr.f32.gmra.mxu0 %v40
    %v495 = vpop.f32.mrf.mxu0
    %v496 = vadd.f32 0.0, %v495
    %v497 = vpop.f32.mrf.mxu0
    %v498 = vadd.f32 0.0, %v497
    %499 = vmatprep.mubr.f32.mxu0 0.0
    %500 = vmatmul.mubr.f32.gmra.mxu0 %v43
    %v501 = vpop.f32.mrf.mxu0
    %v502 = vadd.f32 0.0, %v501
    %v503 = vpop.f32.mrf.mxu0
    %v504 = vadd.f32 0.0, %v503
    %505 = vmatprep.mubr.f32.mxu0 0.0
    %506 = vmatmul.mubr.f32.gmra.mxu0 %v46
    %v507 = vpop.f32.mrf.mxu0
    %v508 = vadd.f32 0.0, %v507
    %v509 = vpop.f32.mrf.mxu0
    %v510 = vadd.f32 0.0, %v509
    %511 = vmatprep.mubr.f32.mxu0 0.0
    %512 = vmatmul.mubr.f32.gmra.mxu0 %v49
    %v513 = vpop.f32.mrf.mxu0
    %v514 = vadd.f32 0.0, %v513
    %v515 = vpop.f32.mrf.mxu0
    %v516 = vadd.f32 0.0, %v515
    %517 = vmatprep.mubr.f32.mxu0 0.0
    %518 = vmatmul.mubr.f32.gmra.mxu0 %v52
    %v519 = vpop.f32.mrf.mxu0
    %v520 = vadd.f32 0.0, %v519
    %v521 = vpop.f32.mrf.mxu0
    %v522 = vadd.f32 0.0, %v521
    %523 = vmatprep.mubr.f32.mxu0 0.0
    %524 = vmatmul.mubr.f32.gmra.mxu0 %v55
    %v525 = vpop.f32.mrf.mxu0
    %v526 = vadd.f32 0.0, %v525
    %v527 = vpop.f32.mrf.mxu0
    %v528 = vadd.f32 0.0, %v527
    %529 = vmatprep.mubr.f32.mxu0 0.0
    %530 = vmatmul.mubr.f32.gmra.mxu0 %v58
    %v531 = vpop.f32.mrf.mxu0
    %v532 = vadd.f32 0.0, %v531
    %v533 = vpop.f32.mrf.mxu0
    %v534 = vadd.f32 0.0, %v533
    %535 = vdwg.mxu0
    %v536 = vmax.f32 %v127, 0.0
    %v537 = vmax.f32 %v129, 0.0
    %v538 = vmax.f32 %v246, 0.0
    %v539 = vmax.f32 %v248, 0.0
    %v540 = vmax.f32 %v365, 0.0
    %v541 = vmax.f32 %v367, 0.0
    %v542 = vmax.f32 %v484, 0.0
    %v543 = vmax.f32 %v486, 0.0
    %v544 = vmax.f32 %v133, 0.0
    %v545 = vmax.f32 %v135, 0.0
    %v546 = vmax.f32 %v252, 0.0
    %v547 = vmax.f32 %v254, 0.0
    %v548 = vmax.f32 %v371, 0.0
    %v549 = vmax.f32 %v373, 0.0
    %v550 = vmax.f32 %v490, 0.0
    %v551 = vmax.f32 %v492, 0.0
    %v552 = vmax.f32 %v139, 0.0
    %v553 = vmax.f32 %v141, 0.0
    %v554 = vmax.f32 %v258, 0.0
    %v555 = vmax.f32 %v260, 0.0
    %v556 = vmax.f32 %v377, 0.0
    %v557 = vmax.f32 %v379, 0.0
    %v558 = vmax.f32 %v496, 0.0
    %v559 = vmax.f32 %v498, 0.0
    %v560 = vmax.f32 %v145, 0.0
    %v561 = vmax.f32 %v147, 0.0
    %v562 = vmax.f32 %v264, 0.0
    %v563 = vmax.f32 %v266, 0.0
    %v564 = vmax.f32 %v383, 0.0
    %v565 = vmax.f32 %v385, 0.0
    %v566 = vmax.f32 %v502, 0.0
    %v567 = vmax.f32 %v504, 0.0
    %v568 = vmax.f32 %v151, 0.0
    %v569 = vmax.f32 %v153, 0.0
    %v570 = vmax.f32 %v270, 0.0
    %v571 = vmax.f32 %v272, 0.0
    %v572 = vmax.f32 %v389, 0.0
    %v573 = vmax.f32 %v391, 0.0
    %v574 = vmax.f32 %v508, 0.0
    %v575 = vmax.f32 %v510, 0.0
    %v576 = vmax.f32 %v157, 0.0
    %v577 = vmax.f32 %v159, 0.0
    %v578 = vmax.f32 %v276, 0.0
    %v579 = vmax.f32 %v278, 0.0
    %v580 = vmax.f32 %v395, 0.0
    %v581 = vmax.f32 %v397, 0.0
    %v582 = vmax.f32 %v514, 0.0
    %v583 = vmax.f32 %v516, 0.0
    %v584 = vmax.f32 %v163, 0.0
    %v585 = vmax.f32 %v165, 0.0
    %v586 = vmax.f32 %v282, 0.0
    %v587 = vmax.f32 %v284, 0.0
    %v588 = vmax.f32 %v401, 0.0
    %v589 = vmax.f32 %v403, 0.0
    %v590 = vmax.f32 %v520, 0.0
    %v591 = vmax.f32 %v522, 0.0
    %v592 = vmax.f32 %v169, 0.0
    %v593 = vmax.f32 %v171, 0.0
    %v594 = vmax.f32 %v288, 0.0
    %v595 = vmax.f32 %v290, 0.0
    %v596 = vmax.f32 %v407, 0.0
    %v597 = vmax.f32 %v409, 0.0
    %v598 = vmax.f32 %v526, 0.0
    %v599 = vmax.f32 %v528, 0.0
    %v600 = vmax.f32 %v175, 0.0
    %v601 = vmax.f32 %v177, 0.0
    %v602 = vmax.f32 %v294, 0.0
    %v603 = vmax.f32 %v296, 0.0
    %v604 = vmax.f32 %v413, 0.0
    %v605 = vmax.f32 %v415, 0.0
    %v606 = vmax.f32 %v532, 0.0
    %v607 = vmax.f32 %v534, 0.0
    %v608 = vld [vmem:[%s2] sm:$0x3]
    %vm609 = vcmask 588800
    %v611 = vsel %vm609, %v608, 0
    %613 = vmatprep.subr.mxu0 0.0
    %614 = vmatpush1.msra.mxu0 0.0
    %615 = vmatprep.subr.mxu0 0.0
    %616 = vmatpush1.msra.mxu0 0.0
    %617 = vmatprep.subr.mxu0 0.0
    %618 = vmatpush1.msra.mxu0 0.0
    %619 = vmatprep.subr.mxu0 0.0
    %620 = vmatpush1.msra.mxu0 0.0
    %621 = vmatprep.subr.mxu0 0.0
    %622 = vmatpush1.msra.mxu0 0.0
    %623 = vmatprep.subr.mxu0 0.0
    %624 = vmatpush1.msra.mxu0 0.0
    %625 = vmatprep.subr.mxu0 0.0
    %626 = vmatpush1.msra.mxu0 0.0
    %627 = vmatprep.subr.mxu0 %v601
    %628 = vmatpush1.msra.mxu0 %v600
    %629 = vmatprep.subr.mxu0 %v593
    %630 = vmatpush1.msra.mxu0 %v592
    %631 = vmatprep.subr.mxu0 %v585
    %632 = vmatpush1.msra.mxu0 %v584
    %633 = vmatprep.subr.mxu0 %v577
    %634 = vmatpush1.msra.mxu0 %v576
    %635 = vmatprep.subr.mxu0 %v569
    %636 = vmatpush1.msra.mxu0 %v568
    %637 = vmatprep.subr.mxu0 %v561
    %638 = vmatpush1.msra.mxu0 %v560
    %639 = vmatprep.subr.mxu0 %v553
    %640 = vmatpush1.msra.mxu0 %v552
    %641 = vmatprep.subr.mxu0 %v545
    %642 = vmatpush1.msra.mxu0 %v544
    %643 = vmatprep.subr.mxu0 %v537
    %644 = vmatpush1.msra.mxu0 %v536
    %645 = vmatprep.subr.mxu0 0.0
    %646 = vmatpush2.msra.mxu0 0.0
    %647 = vmatprep.subr.mxu0 0.0
    %648 = vmatpush2.msra.mxu0 0.0
    %649 = vmatprep.subr.mxu0 0.0
    %650 = vmatpush2.msra.mxu0 0.0
    %651 = vmatprep.subr.mxu0 0.0
    %652 = vmatpush2.msra.mxu0 0.0
    %653 = vmatprep.subr.mxu0 0.0
    %654 = vmatpush2.msra.mxu0 0.0
    %655 = vmatprep.subr.mxu0 0.0
    %656 = vmatpush2.msra.mxu0 0.0
    %657 = vmatprep.subr.mxu0 0.0
    %658 = vmatpush2.msra.mxu0 0.0
    %659 = vmatprep.subr.mxu0 0.0
    %660 = vmatpush2.msra.mxu0 0.0
    %661 = vmatprep.subr.mxu0 0.0
    %662 = vmatpush2.msra.mxu0 0.0
    %663 = vmatprep.subr.mxu0 0.0
    %664 = vmatpush2.msra.mxu0 0.0
    %665 = vmatprep.subr.mxu0 0.0
    %666 = vmatpush2.msra.mxu0 0.0
    %667 = vmatprep.subr.mxu0 0.0
    %668 = vmatpush2.msra.mxu0 0.0
    %669 = vmatprep.subr.mxu0 0.0
    %670 = vmatpush2.msra.mxu0 0.0
    %671 = vmatprep.subr.mxu0 0.0
    %672 = vmatpush2.msra.mxu0 0.0
    %673 = vmatprep.subr.mxu0 0.0
    %674 = vmatpush2.msra.mxu0 0.0
    %675 = vmatprep.subr.mxu0 0.0
    %676 = vmatpush2.msra.mxu0 0.0
    %677 = vmatprep.mubr.f32.mxu0 0.0
    %678 = vmatmul.mubr.f32.gmra.mxu0 %v611
    %v679 = vpop.f32.mrf.mxu0
    %v680 = vadd.f32 0.0, %v679
    %v681 = vpop.f32.mrf.mxu0
    %v682 = vadd.f32 0.0, %v681
    %683 = vdwg.mxu0
    %684 = vmatprep.subr.mxu0 0.0
    %685 = vmatpush1.msra.mxu0 0.0
    %686 = vmatprep.subr.mxu0 0.0
    %687 = vmatpush1.msra.mxu0 0.0
    %688 = vmatprep.subr.mxu0 0.0
    %689 = vmatpush1.msra.mxu0 0.0
    %690 = vmatprep.subr.mxu0 0.0
    %691 = vmatpush1.msra.mxu0 0.0
    %692 = vmatprep.subr.mxu0 0.0
    %693 = vmatpush1.msra.mxu0 0.0
    %694 = vmatprep.subr.mxu0 0.0
    %695 = vmatpush1.msra.mxu0 0.0
    %696 = vmatprep.subr.mxu0 0.0
    %697 = vmatpush1.msra.mxu0 0.0
    %698 = vmatprep.subr.mxu0 %v603
    %699 = vmatpush1.msra.mxu0 %v602
    %700 = vmatprep.subr.mxu0 %v595
    %701 = vmatpush1.msra.mxu0 %v594
    %702 = vmatprep.subr.mxu0 %v587
    %703 = vmatpush1.msra.mxu0 %v586
    %704 = vmatprep.subr.mxu0 %v579
    %705 = vmatpush1.msra.mxu0 %v578
    %706 = vmatprep.subr.mxu0 %v571
    %707 = vmatpush1.msra.mxu0 %v570
    %708 = vmatprep.subr.mxu0 %v563
    %709 = vmatpush1.msra.mxu0 %v562
    %710 = vmatprep.subr.mxu0 %v555
    %711 = vmatpush1.msra.mxu0 %v554
    %712 = vmatprep.subr.mxu0 %v547
    %713 = vmatpush1.msra.mxu0 %v546
    %714 = vmatprep.subr.mxu0 %v539
    %715 = vmatpush1.msra.mxu0 %v538
    %716 = vmatprep.subr.mxu0 0.0
    %717 = vmatpush2.msra.mxu0 0.0
    %718 = vmatprep.subr.mxu0 0.0
    %719 = vmatpush2.msra.mxu0 0.0
    %720 = vmatprep.subr.mxu0 0.0
    %721 = vmatpush2.msra.mxu0 0.0
    %722 = vmatprep.subr.mxu0 0.0
    %723 = vmatpush2.msra.mxu0 0.0
    %724 = vmatprep.subr.mxu0 0.0
    %725 = vmatpush2.msra.mxu0 0.0
    %726 = vmatprep.subr.mxu0 0.0
    %727 = vmatpush2.msra.mxu0 0.0
    %728 = vmatprep.subr.mxu0 0.0
    %729 = vmatpush2.msra.mxu0 0.0
    %730 = vmatprep.subr.mxu0 0.0
    %731 = vmatpush2.msra.mxu0 0.0
    %732 = vmatprep.subr.mxu0 0.0
    %733 = vmatpush2.msra.mxu0 0.0
    %734 = vmatprep.subr.mxu0 0.0
    %735 = vmatpush2.msra.mxu0 0.0
    %736 = vmatprep.subr.mxu0 0.0
    %737 = vmatpush2.msra.mxu0 0.0
    %738 = vmatprep.subr.mxu0 0.0
    %739 = vmatpush2.msra.mxu0 0.0
    %740 = vmatprep.subr.mxu0 0.0
    %741 = vmatpush2.msra.mxu0 0.0
    %742 = vmatprep.subr.mxu0 0.0
    %743 = vmatpush2.msra.mxu0 0.0
    %744 = vmatprep.subr.mxu0 0.0
    %745 = vmatpush2.msra.mxu0 0.0
    %746 = vmatprep.subr.mxu0 0.0
    %747 = vmatpush2.msra.mxu0 0.0
    %748 = vmatprep.mubr.f32.mxu0 0.0
    %749 = vmatmul.mubr.f32.gmra.mxu0 %v611
    %v750 = vpop.f32.mrf.mxu0
    %v751 = vadd.f32 0.0, %v750
    %v752 = vpop.f32.mrf.mxu0
    %v753 = vadd.f32 0.0, %v752
    %754 = vdwg.mxu0
    %755 = vmatprep.subr.mxu0 0.0
    %756 = vmatpush1.msra.mxu0 0.0
    %757 = vmatprep.subr.mxu0 0.0
    %758 = vmatpush1.msra.mxu0 0.0
    %759 = vmatprep.subr.mxu0 0.0
    %760 = vmatpush1.msra.mxu0 0.0
    %761 = vmatprep.subr.mxu0 0.0
    %762 = vmatpush1.msra.mxu0 0.0
    %763 = vmatprep.subr.mxu0 0.0
    %764 = vmatpush1.msra.mxu0 0.0
    %765 = vmatprep.subr.mxu0 0.0
    %766 = vmatpush1.msra.mxu0 0.0
    %767 = vmatprep.subr.mxu0 0.0
    %768 = vmatpush1.msra.mxu0 0.0
    %769 = vmatprep.subr.mxu0 %v605
    %770 = vmatpush1.msra.mxu0 %v604
    %771 = vmatprep.subr.mxu0 %v597
    %772 = vmatpush1.msra.mxu0 %v596
    %773 = vmatprep.subr.mxu0 %v589
    %774 = vmatpush1.msra.mxu0 %v588
    %775 = vmatprep.subr.mxu0 %v581
    %776 = vmatpush1.msra.mxu0 %v580
    %777 = vmatprep.subr.mxu0 %v573
    %778 = vmatpush1.msra.mxu0 %v572
    %779 = vmatprep.subr.mxu0 %v565
    %780 = vmatpush1.msra.mxu0 %v564
    %781 = vmatprep.subr.mxu0 %v557
    %782 = vmatpush1.msra.mxu0 %v556
    %783 = vmatprep.subr.mxu0 %v549
    %784 = vmatpush1.msra.mxu0 %v548
    %785 = vmatprep.subr.mxu0 %v541
    %786 = vmatpush1.msra.mxu0 %v540
    %787 = vmatprep.subr.mxu0 0.0
    %788 = vmatpush2.msra.mxu0 0.0
    %789 = vmatprep.subr.mxu0 0.0
    %790 = vmatpush2.msra.mxu0 0.0
    %791 = vmatprep.subr.mxu0 0.0
    %792 = vmatpush2.msra.mxu0 0.0
    %793 = vmatprep.subr.mxu0 0.0
    %794 = vmatpush2.msra.mxu0 0.0
    %795 = vmatprep.subr.mxu0 0.0
    %796 = vmatpush2.msra.mxu0 0.0
    %797 = vmatprep.subr.mxu0 0.0
    %798 = vmatpush2.msra.mxu0 0.0
    %799 = vmatprep.subr.mxu0 0.0
    %800 = vmatpush2.msra.mxu0 0.0
    %801 = vmatprep.subr.mxu0 0.0
    %802 = vmatpush2.msra.mxu0 0.0
    %803 = vmatprep.subr.mxu0 0.0
    %804 = vmatpush2.msra.mxu0 0.0
    %805 = vmatprep.subr.mxu0 0.0
    %806 = vmatpush2.msra.mxu0 0.0
    %807 = vmatprep.subr.mxu0 0.0
    %808 = vmatpush2.msra.mxu0 0.0
    %809 = vmatprep.subr.mxu0 0.0
    %810 = vmatpush2.msra.mxu0 0.0
    %811 = vmatprep.subr.mxu0 0.0
    %812 = vmatpush2.msra.mxu0 0.0
    %813 = vmatprep.subr.mxu0 0.0
    %814 = vmatpush2.msra.mxu0 0.0
    %815 = vmatprep.subr.mxu0 0.0
    %816 = vmatpush2.msra.mxu0 0.0
    %817 = vmatprep.subr.mxu0 0.0
    %818 = vmatpush2.msra.mxu0 0.0
    %819 = vmatprep.mubr.f32.mxu0 0.0
    %820 = vmatmul.mubr.f32.gmra.mxu0 %v611
    %v821 = vpop.f32.mrf.mxu0
    %v822 = vadd.f32 0.0, %v821
    %v823 = vpop.f32.mrf.mxu0
    %v824 = vadd.f32 0.0, %v823
    %825 = vdwg.mxu0
    %826 = vmatprep.subr.mxu0 0.0
    %827 = vmatpush1.msra.mxu0 0.0
    %828 = vmatprep.subr.mxu0 0.0
    %829 = vmatpush1.msra.mxu0 0.0
    %830 = vmatprep.subr.mxu0 0.0
    %831 = vmatpush1.msra.mxu0 0.0
    %832 = vmatprep.subr.mxu0 0.0
    %833 = vmatpush1.msra.mxu0 0.0
    %834 = vmatprep.subr.mxu0 0.0
    %835 = vmatpush1.msra.mxu0 0.0
    %836 = vmatprep.subr.mxu0 0.0
    %837 = vmatpush1.msra.mxu0 0.0
    %838 = vmatprep.subr.mxu0 0.0
    %839 = vmatpush1.msra.mxu0 0.0
    %840 = vmatprep.subr.mxu0 %v607
    %841 = vmatpush1.msra.mxu0 %v606
    %842 = vmatprep.subr.mxu0 %v599
    %843 = vmatpush1.msra.mxu0 %v598
    %844 = vmatprep.subr.mxu0 %v591
    %845 = vmatpush1.msra.mxu0 %v590
    %846 = vmatprep.subr.mxu0 %v583
    %847 = vmatpush1.msra.mxu0 %v582
    %848 = vmatprep.subr.mxu0 %v575
    %849 = vmatpush1.msra.mxu0 %v574
    %850 = vmatprep.subr.mxu0 %v567
    %851 = vmatpush1.msra.mxu0 %v566
    %852 = vmatprep.subr.mxu0 %v559
    %853 = vmatpush1.msra.mxu0 %v558
    %854 = vmatprep.subr.mxu0 %v551
    %855 = vmatpush1.msra.mxu0 %v550
    %856 = vmatprep.subr.mxu0 %v543
    %857 = vmatpush1.msra.mxu0 %v542
    %858 = vmatprep.subr.mxu0 0.0
    %859 = vmatpush2.msra.mxu0 0.0
    %860 = vmatprep.subr.mxu0 0.0
    %861 = vmatpush2.msra.mxu0 0.0
    %862 = vmatprep.subr.mxu0 0.0
    %863 = vmatpush2.msra.mxu0 0.0
    %864 = vmatprep.subr.mxu0 0.0
    %865 = vmatpush2.msra.mxu0 0.0
    %866 = vmatprep.subr.mxu0 0.0
    %867 = vmatpush2.msra.mxu0 0.0
    %868 = vmatprep.subr.mxu0 0.0
    %869 = vmatpush2.msra.mxu0 0.0
    %870 = vmatprep.subr.mxu0 0.0
    %871 = vmatpush2.msra.mxu0 0.0
    %872 = vmatprep.subr.mxu0 0.0
    %873 = vmatpush2.msra.mxu0 0.0
    %874 = vmatprep.subr.mxu0 0.0
    %875 = vmatpush2.msra.mxu0 0.0
    %876 = vmatprep.subr.mxu0 0.0
    %877 = vmatpush2.msra.mxu0 0.0
    %878 = vmatprep.subr.mxu0 0.0
    %879 = vmatpush2.msra.mxu0 0.0
    %880 = vmatprep.subr.mxu0 0.0
    %881 = vmatpush2.msra.mxu0 0.0
    %882 = vmatprep.subr.mxu0 0.0
    %883 = vmatpush2.msra.mxu0 0.0
    %884 = vmatprep.subr.mxu0 0.0
    %885 = vmatpush2.msra.mxu0 0.0
    %886 = vmatprep.subr.mxu0 0.0
    %887 = vmatpush2.msra.mxu0 0.0
    %888 = vmatprep.subr.mxu0 0.0
    %889 = vmatpush2.msra.mxu0 0.0
    %890 = vmatprep.mubr.f32.mxu0 0.0
    %891 = vmatmul.mubr.f32.gmra.mxu0 %v611
    %v892 = vpop.f32.mrf.mxu0
    %v893 = vadd.f32 0.0, %v892
    %v894 = vpop.f32.mrf.mxu0
    %v895 = vadd.f32 0.0, %v894
    %896 = vdwg.mxu0
    %v905 = vcombine.low %v680, %v682
    %v906 = vcombine.low %v751, %v753
    %v908 = vunpack.c.l.s4 1983009808
    %v909 = vunpack.c.0.s8 %v908
    %v910 = vlaneseq
    %v911 = vshrl.u32 %v910, 7
    %v912 = vsub.s32 %v909, %v911
    %v913 = vrot.slane %v905, %v912
    %v915 = vunpack.c.l.s4 1983009808
    %v916 = vunpack.c.0.s8 %v915
    %v917 = vlaneseq
    %v918 = vshrl.u32 %v917, 7
    %v919 = vsub.s32 %v916, %v918
    %v920 = vrot.slane %v906, %v919
    %v921 = vcombine.low %v913, %v920
    %v922 = vcombine.low %v822, %v824
    %v923 = vcombine.low %v893, %v895
    %v925 = vunpack.c.l.s4 1983009808
    %v926 = vunpack.c.0.s8 %v925
    %v927 = vlaneseq
    %v928 = vshrl.u32 %v927, 7
    %v929 = vsub.s32 %v926, %v928
    %v930 = vrot.slane %v922, %v929
    %v932 = vunpack.c.l.s4 1983009808
    %v933 = vunpack.c.0.s8 %v932
    %v934 = vlaneseq
    %v935 = vshrl.u32 %v934, 7
    %v936 = vsub.s32 %v933, %v935
    %v937 = vrot.slane %v923, %v936
    %v938 = vcombine.low %v930, %v937
    %941 = vst [vmem:[#allocation2] sm:$0xff] %v921
    %942 = vst [vmem:[#allocation2 + $0x8] sm:$0xff] %v938
    // Predicated region
    $region14: #{tpu_custom_call.1} parent=1 // pred_check
      _
    $region15: #{tpu_custom_call.1} parent=1 // pred_check_branch
      %944 = sbr.rel (0) target = $region17
    $region16: #{tpu_custom_call.1} parent=1 // pred_region
      %s946 = ssub.s32 256, 256
      %947 = vsyncadd [#allocation3], %s946
      %s949 = sshll.u32 [#allocation2], 4
      %s950 = int_to_ptr.vmem [resolvable:$true] %s949
      %952 = dma.vmem_to_hbm [thread:$0]  %s950, 256, %s3, [#allocation3]
    $region17: #{tpu_custom_call.1} parent=1 // pred_fallthru
      _
    // Predicated region
    $region18: #{tpu_custom_call.1} parent=1 // pred_check
      _
    $region19: #{tpu_custom_call.1} parent=1 // pred_check_branch
      %954 = sbr.rel (0) target = $region21
    $region20: #{tpu_custom_call.1} parent=1 // pred_region
      %955 = dma.done [#allocation3], 256
    $region21: #{tpu_custom_call.1} parent=1 // pred_fallthru
      _
    %956 = vsyncpa [#allocation3], 1

</llo_original>
